<compile_context>
chip_gen: v6e
topology: v6e:2x2x1
jax: 0.10.0
libtpu: 0.0.40
codegen_flags: <defaults>
</compile_context>

<pallas_src>
import functools

import jax
import jax.numpy as jnp
from jax.experimental import pallas as pl
from jax.experimental.pallas import tpu as pltpu

LANE = 128  # all weight blocks / activations are zero-padded to 128 lanes


# -----------------------------------------------------------------------------
# Fused forward kernel (no grid; everything is a whole VMEM block).
# -----------------------------------------------------------------------------
def fused_forward_kernel(qmean_ref, patches_ref, hprev_ref, w_ref, b_ref, out_ref):
    """Weight slab row layout (each block zero-padded to 128 lanes):

      rows [  0,128)  wq    question Linear                 (Dq x Dq real)
      rows [128,256)  wc    3x3 conv as matmul              (K  x Cc real)
      rows [256,384)  wv    vision Linear                   (Cc x Dv real)
      rows [384,768)  wrnn  [wih_q; wih_g; whh], each block padded to 128 rows
      rows [768,896)  wout  [I_H | wm | wb | wp | 0]        (H x 128, fused heads)

    Bias slab rows: 0=bq, 1=bc, 2=bv, 3=bih+bhh, 4=[0 | bm | bb | bp | 0].
    Output: one lane-dense (B, 128) slab = [h_t | m_t | b_t | p_t | 0...].
    """
    f32 = jnp.float32

    # -- static, sublane-aligned views into the packed slabs (single DMA each) --
    w_q = w_ref[0 * LANE:1 * LANE, :]
    w_c = w_ref[1 * LANE:2 * LANE, :]
    w_v = w_ref[2 * LANE:3 * LANE, :]
    w_rnn = w_ref[3 * LANE:6 * LANE, :]
    w_out = w_ref[6 * LANE:7 * LANE, :]
    b_q = b_ref[0:1, :]
    b_c = b_ref[1:2, :]
    b_v = b_ref[2:3, :]
    b_rnn = b_ref[3:4, :]
    b_out = b_ref[4:5, :]

    # ---- question branch: (token mean done in wrapper) -> Linear -> ReLU -----
    q = jnp.maximum(
        jnp.dot(qmean_ref[...], w_q, preferred_element_type=f32) + b_q, 0.0)

    # ---- vision branch: conv-as-matmul -> ReLU -> global avg pool -> Linear --
    batch = patches_ref.shape[0]
    pooled_rows = []
    for b in range(batch):  # B is tiny and static -> unrolled, 2-D matmuls only
        conv_b = jnp.maximum(
            jnp.dot(patches_ref[b], w_c, preferred_element_type=f32) + b_c, 0.0)
        pooled_rows.append(jnp.mean(conv_b, axis=0, keepdims=True))
    pooled = jnp.concatenate(pooled_rows, axis=0)                      # (B, 128)
    g = jnp.maximum(
        jnp.dot(pooled, w_v, preferred_element_type=f32) + b_v, 0.0)

    # ---- RNN cell: h = tanh([q | g | h_prev] @ Wrnn + (bih + bhh)) -----------
    x = jnp.concatenate([q, g, hprev_ref[...]], axis=-1)               # (B, 384)
    h = jnp.tanh(jnp.dot(x, w_rnn, preferred_element_type=f32) + b_rnn)

    # ---- fused heads + hidden passthrough: one lane-dense store --------------
    out_ref[...] = jnp.dot(h, w_out, preferred_element_type=f32) + b_out


# -----------------------------------------------------------------------------
# JAX glue.
# -----------------------------------------------------------------------------
def _im2col_nchw(x, kh=3, kw=3):
    """x: (B, C, H, W) float32 -> patches (B, Ho*Wo, C*kh*kw), valid conv."""
    B, C, H, W = x.shape
    Ho, Wo = H - kh + 1, W - kw + 1
    cols = []
    for i in range(kh):
        for j in range(kw):
            cols.append(x[:, :, i:i + Ho, j:j + Wo])          # (B, C, Ho, Wo)
    p = jnp.stack(cols, axis=2)                               # (B, C, kh*kw, Ho, Wo)
    return p.transpose(0, 3, 4, 1, 2).reshape(B, Ho * Wo, C * kh * kw)


def _pad_lanes(x, lane=LANE):
    x = x.astype(jnp.float32)
    pad = lane - x.shape[-1]
    if pad <= 0:
        return x
    cfg = [(0, 0)] * (x.ndim - 1) + [(0, pad)]
    return jnp.pad(x, cfg)


@functools.partial(jax.jit, static_argnames=("dims", "last"))
def model_forward(w_slab, b_slab, embed, question, rgb_image, h_prev, *,
                  dims, last=False):
    H, Nm, Na = dims
    B = question.shape[0]

    # glue: data-dependent embedding gather + token mean stay in JAX
    q_emb = jnp.take(embed, question, axis=0)                 # (B, L, Dq)
    qmean = _pad_lanes(jnp.mean(q_emb, axis=1))               # (B, 128)
    # glue: im2col patch extraction
    patches = _pad_lanes(_im2col_nchw(rgb_image.astype(jnp.float32)))   # (B, P, 128)
    hprev = _pad_lanes(h_prev)                                # (B, 128)

    vmem = pl.BlockSpec(memory_space=pltpu.MemorySpace.VMEM)
    out = pl.pallas_call(
        fused_forward_kernel,
        out_shape=jax.ShapeDtypeStruct((B, LANE), jnp.float32),
        in_specs=[vmem] * 5,
        out_specs=vmem,
        compiler_params=pltpu.CompilerParams(vmem_limit_bytes=8 * 1024 * 1024),
    )(qmean, patches, hprev, w_slab, b_slab)

    # slice the fused lane-dense output apart
    h_t = out[:, :H]
    m_t = out[:, H:H + Nm]
    b_t = jnp.squeeze(out[:, H + Nm:H + Nm + 1])  # mirrors reference .squeeze()
    p_t = out[:, H + Nm + 1:H + Nm + 1 + Na]
    if last:
        return p_t
    return h_t, m_t, b_t


# -----------------------------------------------------------------------------
# Parameters (natural layout) + packing into the two slabs the kernel expects.
# -----------------------------------------------------------------------------
def init_params(key, dict_len, question_dim, vision_dim, rnn_hidden_size,
                num_mclasses, num_aclasses, conv_channels=8, kh=3, kw=3, cin=3):
    ks = jax.random.split(key, 18)
    n = lambda k, shape: (0.1 * jax.random.normal(k, shape)).astype(jnp.float32)
    K = cin * kh * kw
    return {
        "embed": n(ks[0], (dict_len, question_dim)),
        "wq":    n(ks[1], (question_dim, question_dim)),
        "bq":    n(ks[2], (1, question_dim)),
        "wc":    n(ks[3], (K, conv_channels)),
        "bc":    n(ks[4], (1, conv_channels)),
        "wv":    n(ks[5], (conv_channels, vision_dim)),
        "bv":    n(ks[6], (1, vision_dim)),
        "wih_q": n(ks[7], (question_dim, rnn_hidden_size)),
        "wih_g": n(ks[8], (vision_dim, rnn_hidden_size)),
        "bih":   n(ks[9], (1, rnn_hidden_size)),
        "whh":   n(ks[10], (rnn_hidden_size, rnn_hidden_size)),
        "bhh":   n(ks[11], (1, rnn_hidden_size)),
        "wm":    n(ks[12], (rnn_hidden_size, num_mclasses)),
        "bm":    n(ks[13], (1, num_mclasses)),
        "wb":    n(ks[14], (rnn_hidden_size, 1)),
        "bb":    n(ks[15], (1, 1)),
        "wp":    n(ks[16], (rnn_hidden_size, num_aclasses)),
        "bp":    n(ks[17], (1, num_aclasses)),
    }


def pack_params(p, *, Dq, Cc, Dv, H, Nm, Na):
    """Pack all weights into one (896,128) slab and all biases into (8,128)."""
    f32 = jnp.float32

    def block(w):
        blk = jnp.zeros((LANE, LANE), f32)
        return blk.at[: w.shape[0], : w.shape[1]].set(w)

    w_q = block(p["wq"])
    w_c = block(p["wc"])
    w_v = block(p["wv"])

    w_rnn = jnp.zeros((3 * LANE, LANE), f32)
    w_rnn = w_rnn.at[0:Dq, 0:H].set(p["wih_q"])
    w_rnn = w_rnn.at[LANE:LANE + Dv, 0:H].set(p["wih_g"])
    w_rnn = w_rnn.at[2 * LANE:2 * LANE + H, 0:H].set(p["whh"])

    w_out = jnp.zeros((LANE, LANE), f32)
    w_out = w_out.at[0:H, 0:H].set(jnp.eye(H, dtype=f32))     # h passthrough
    w_out = w_out.at[0:H, H:H + Nm].set(p["wm"])
    w_out = w_out.at[0:H, H + Nm:H + Nm + 1].set(p["wb"])
    w_out = w_out.at[0:H, H + Nm + 1:H + Nm + 1 + Na].set(p["wp"])

    w_slab = jnp.concatenate([w_q, w_c, w_v, w_rnn, w_out], axis=0)   # (896, 128)

    def brow(b):
        row = jnp.zeros((1, LANE), f32)
        return row.at[:, : b.shape[-1]].set(b.reshape(1, -1))

    b_out = jnp.zeros((1, LANE), f32)
    b_out = b_out.at[:, H:H + Nm].set(p["bm"].reshape(1, -1))
    b_out = b_out.at[:, H + Nm:H + Nm + 1].set(p["bb"].reshape(1, -1))
    b_out = b_out.at[:, H + Nm + 1:H + Nm + 1 + Na].set(p["bp"].reshape(1, -1))

    b_slab = jnp.concatenate(
        [brow(p["bq"]), brow(p["bc"]), brow(p["bv"]),
         brow(p["bih"] + p["bhh"]), b_out, jnp.zeros((3, LANE), f32)],
        axis=0)                                                        # (8, 128)

    return w_slab, b_slab


# -----------------------------------------------------------------------------
# Pure-JAX reference (same canonical sub-modules) for a correctness check.
# -----------------------------------------------------------------------------
def _reference_forward(params, question, rgb_image, h_prev):
    q_emb = jnp.take(params["embed"], question, axis=0)
    q = jax.nn.relu(jnp.mean(q_emb, axis=1) @ params["wq"] + params["bq"])
    patches = _im2col_nchw(rgb_image.astype(jnp.float32))
    conv = jax.nn.relu(patches @ params["wc"] + params["bc"])
    pooled = jnp.mean(conv, axis=1)
    g = jax.nn.relu(pooled @ params["wv"] + params["bv"])
    pre = (q @ params["wih_q"] + g @ params["wih_g"] + params["bih"]
           + h_prev @ params["whh"] + params["bhh"])
    h = jnp.tanh(pre)
    m = h @ params["wm"] + params["bm"]
    b = jnp.squeeze(h @ params["wb"] + params["bb"])
    p = h @ params["wp"] + params["bp"]
    return h, m, b, p


if __name__ == "__main__":
    # small shapes consistent with the module's forward
    B, L = 2, 8
    dict_len, Dq, Dv = 32, 16, 16
    H = 32                       # rnn_hidden_size (rnn_input_dim = Dq + Dv = 32)
    Nm, Na = 4, 8
    Cc = 8
    img_h = img_w = 8

    key = jax.random.PRNGKey(0)
    k_p, k_q, k_img, k_h = jax.random.split(key, 4)

    params = init_params(k_p, dict_len, Dq, Dv, H, Nm, Na, conv_channels=Cc)
    w_slab, b_slab = pack_params(params, Dq=Dq, Cc=Cc, Dv=Dv, H=H, Nm=Nm, Na=Na)

    question = jax.random.randint(k_q, (B, L), 0, dict_len)                   # token ids
    rgb_image = jax.random.normal(k_img, (B, 3, img_h, img_w), jnp.float32)   # NCHW
    h_prev = jax.random.normal(k_h, (B, H), jnp.float32)

    dims = (H, Nm, Na)

    # last=False path: (h_t, m_t, b_t)
    h_t, m_t, b_t = model_forward(w_slab, b_slab, params["embed"],
                                  question, rgb_image, h_prev,
                                  dims=dims, last=False)
    jax.block_until_ready((h_t, m_t, b_t))
    assert h_t.shape == (B, H)
    assert m_t.shape == (B, Nm)
    assert b_t.shape == (B,)

    # last=True path: p_t
    p_t = model_forward(w_slab, b_slab, params["embed"],
                        question, rgb_image, h_prev, dims=dims, last=True)
    jax.block_until_ready(p_t)
    assert p_t.shape == (B, Na)

    # correctness vs. pure-JAX reference
    h_r, m_r, b_r, p_r = _reference_forward(params, question, rgb_image, h_prev)
    assert jnp.allclose(h_t, h_r, atol=2e-2, rtol=2e-2)
    assert jnp.allclose(m_t, m_r, atol=2e-2, rtol=2e-2)
    assert jnp.allclose(b_t, b_r, atol=2e-2, rtol=2e-2)
    assert jnp.allclose(p_t, p_r, atol=2e-2, rtol=2e-2)

    print("KERNEL_OK")
</pallas_src>

<mosaic_0001>
module attributes {stable_mosaic.version = 11 : i64} {
  func.func @fused_forward_kernel(%arg0: memref<2x128xf32, #tpu.memory_space<vmem>>, %arg1: memref<2x36x128xf32, #tpu.memory_space<vmem>>, %arg2: memref<2x128xf32, #tpu.memory_space<vmem>>, %arg3: memref<896x128xf32, #tpu.memory_space<vmem>>, %arg4: memref<8x128xf32, #tpu.memory_space<vmem>>, %arg5: memref<2x128xf32, #tpu.memory_space<vmem>>) attributes {dimension_semantics = [], scalar_prefetch = 0 : i64, scratch_operands = 0 : i64, tpu.core_type = #tpu.core_type<tc>} {
    %c0 = arith.constant 0 : index
    %c0_0 = arith.constant 0 : index
    %0 = vector.load %arg3[%c0, %c0_0] : memref<896x128xf32, #tpu.memory_space<vmem>>, vector<128x128xf32>
    %c128 = arith.constant 128 : index
    %c0_1 = arith.constant 0 : index
    %1 = vector.load %arg3[%c128, %c0_1] : memref<896x128xf32, #tpu.memory_space<vmem>>, vector<128x128xf32>
    %c256 = arith.constant 256 : index
    %c0_2 = arith.constant 0 : index
    %2 = vector.load %arg3[%c256, %c0_2] : memref<896x128xf32, #tpu.memory_space<vmem>>, vector<128x128xf32>
    %c384 = arith.constant 384 : index
    %c0_3 = arith.constant 0 : index
    %3 = vector.load %arg3[%c384, %c0_3] : memref<896x128xf32, #tpu.memory_space<vmem>>, vector<384x128xf32>
    %c768 = arith.constant 768 : index
    %c0_4 = arith.constant 0 : index
    %4 = vector.load %arg3[%c768, %c0_4] : memref<896x128xf32, #tpu.memory_space<vmem>>, vector<128x128xf32>
    %c0_5 = arith.constant 0 : index
    %c0_6 = arith.constant 0 : index
    %5 = vector.load %arg4[%c0_5, %c0_6] : memref<8x128xf32, #tpu.memory_space<vmem>>, vector<1x128xf32>
    %c1 = arith.constant 1 : index
    %c0_7 = arith.constant 0 : index
    %6 = vector.load %arg4[%c1, %c0_7] : memref<8x128xf32, #tpu.memory_space<vmem>>, vector<1x128xf32>
    %c2 = arith.constant 2 : index
    %c0_8 = arith.constant 0 : index
    %7 = vector.load %arg4[%c2, %c0_8] : memref<8x128xf32, #tpu.memory_space<vmem>>, vector<1x128xf32>
    %c3 = arith.constant 3 : index
    %c0_9 = arith.constant 0 : index
    %8 = vector.load %arg4[%c3, %c0_9] : memref<8x128xf32, #tpu.memory_space<vmem>>, vector<1x128xf32>
    %c4 = arith.constant 4 : index
    %c0_10 = arith.constant 0 : index
    %9 = vector.load %arg4[%c4, %c0_10] : memref<8x128xf32, #tpu.memory_space<vmem>>, vector<1x128xf32>
    %c0_11 = arith.constant 0 : index
    %c0_12 = arith.constant 0 : index
    %10 = vector.load %arg0[%c0_11, %c0_12] : memref<2x128xf32, #tpu.memory_space<vmem>>, vector<2x128xf32>
    %cst = arith.constant dense<0.000000e+00> : vector<2x128xf32>
    %11 = tpu.matmul %10, %0, %cst {dimension_numbers = #tpu.dot_dimension_numbers<[1], [0], [0], [1], [0, 0, 1, 1], [], []>} : vector<2x128xf32>, vector<128x128xf32>, vector<2x128xf32> -> vector<2x128xf32>
    %12 = vector.broadcast %5 : vector<1x128xf32> to vector<2x128xf32>
    %13 = arith.addf %11, %12 : vector<2x128xf32>
    %cst_13 = arith.constant 0.000000e+00 : f32
    %14 = vector.broadcast %cst_13 : f32 to vector<2x128xf32>
    %15 = arith.maximumf %13, %14 : vector<2x128xf32>
    %c0_14 = arith.constant 0 : index
    %c0_15 = arith.constant 0 : index
    %c0_16 = arith.constant 0 : index
    %16 = vector.load %arg1[%c0_14, %c0_15, %c0_16] : memref<2x36x128xf32, #tpu.memory_space<vmem>>, vector<1x36x128xf32>
    %17 = vector.shape_cast %16 : vector<1x36x128xf32> to vector<36x128xf32>
    %cst_17 = arith.constant dense<0.000000e+00> : vector<36x128xf32>
    %18 = tpu.matmul %17, %1, %cst_17 {dimension_numbers = #tpu.dot_dimension_numbers<[1], [0], [0], [1], [0, 0, 1, 1], [], []>} : vector<36x128xf32>, vector<128x128xf32>, vector<36x128xf32> -> vector<36x128xf32>
    %19 = vector.broadcast %6 : vector<1x128xf32> to vector<36x128xf32>
    %20 = arith.addf %18, %19 : vector<36x128xf32>
    %cst_18 = arith.constant 0.000000e+00 : f32
    %21 = vector.broadcast %cst_18 : f32 to vector<36x128xf32>
    %22 = arith.maximumf %20, %21 : vector<36x128xf32>
    %cst_19 = arith.constant dense<0.000000e+00> : vector<128xf32>
    %23 = vector.multi_reduction <add>, %22, %cst_19 [0] : vector<36x128xf32> to vector<128xf32>
    %24 = vector.shape_cast %23 : vector<128xf32> to vector<1x128xf32>
    %cst_20 = arith.constant 3.600000e+01 : f32
    %25 = vector.broadcast %cst_20 : f32 to vector<1x128xf32>
    %26 = arith.divf %24, %25 : vector<1x128xf32>
    %c1_21 = arith.constant 1 : index
    %c0_22 = arith.constant 0 : index
    %c0_23 = arith.constant 0 : index
    %27 = vector.load %arg1[%c1_21, %c0_22, %c0_23] : memref<2x36x128xf32, #tpu.memory_space<vmem>>, vector<1x36x128xf32>
    %28 = vector.shape_cast %27 : vector<1x36x128xf32> to vector<36x128xf32>
    %cst_24 = arith.constant dense<0.000000e+00> : vector<36x128xf32>
    %29 = tpu.matmul %28, %1, %cst_24 {dimension_numbers = #tpu.dot_dimension_numbers<[1], [0], [0], [1], [0, 0, 1, 1], [], []>} : vector<36x128xf32>, vector<128x128xf32>, vector<36x128xf32> -> vector<36x128xf32>
    %30 = vector.broadcast %6 : vector<1x128xf32> to vector<36x128xf32>
    %31 = arith.addf %29, %30 : vector<36x128xf32>
    %cst_25 = arith.constant 0.000000e+00 : f32
    %32 = vector.broadcast %cst_25 : f32 to vector<36x128xf32>
    %33 = arith.maximumf %31, %32 : vector<36x128xf32>
    %cst_26 = arith.constant dense<0.000000e+00> : vector<128xf32>
    %34 = vector.multi_reduction <add>, %33, %cst_26 [0] : vector<36x128xf32> to vector<128xf32>
    %35 = vector.shape_cast %34 : vector<128xf32> to vector<1x128xf32>
    %cst_27 = arith.constant 3.600000e+01 : f32
    %36 = vector.broadcast %cst_27 : f32 to vector<1x128xf32>
    %37 = arith.divf %35, %36 : vector<1x128xf32>
    %38 = tpu.concatenate %26, %37 in 0 : vector<1x128xf32>, vector<1x128xf32> -> vector<2x128xf32>
    %cst_28 = arith.constant dense<0.000000e+00> : vector<2x128xf32>
    %39 = tpu.matmul %38, %2, %cst_28 {dimension_numbers = #tpu.dot_dimension_numbers<[1], [0], [0], [1], [0, 0, 1, 1], [], []>} : vector<2x128xf32>, vector<128x128xf32>, vector<2x128xf32> -> vector<2x128xf32>
    %40 = vector.broadcast %7 : vector<1x128xf32> to vector<2x128xf32>
    %41 = arith.addf %39, %40 : vector<2x128xf32>
    %cst_29 = arith.constant 0.000000e+00 : f32
    %42 = vector.broadcast %cst_29 : f32 to vector<2x128xf32>
    %43 = arith.maximumf %41, %42 : vector<2x128xf32>
    %c0_30 = arith.constant 0 : index
    %c0_31 = arith.constant 0 : index
    %44 = vector.load %arg2[%c0_30, %c0_31] : memref<2x128xf32, #tpu.memory_space<vmem>>, vector<2x128xf32>
    %45 = tpu.concatenate %15, %43, %44 in 1 : vector<2x128xf32>, vector<2x128xf32>, vector<2x128xf32> -> vector<2x384xf32>
    %cst_32 = arith.constant dense<0.000000e+00> : vector<2x128xf32>
    %46 = tpu.matmul %45, %3, %cst_32 {dimension_numbers = #tpu.dot_dimension_numbers<[1], [0], [0], [1], [0, 0, 1, 1], [], []>} : vector<2x384xf32>, vector<384x128xf32>, vector<2x128xf32> -> vector<2x128xf32>
    %47 = vector.broadcast %8 : vector<1x128xf32> to vector<2x128xf32>
    %48 = arith.addf %46, %47 : vector<2x128xf32>
    %49 = math.tanh %48 : vector<2x128xf32>
    %cst_33 = arith.constant dense<0.000000e+00> : vector<2x128xf32>
    %50 = tpu.matmul %49, %4, %cst_33 {dimension_numbers = #tpu.dot_dimension_numbers<[1], [0], [0], [1], [0, 0, 1, 1], [], []>} : vector<2x128xf32>, vector<128x128xf32>, vector<2x128xf32> -> vector<2x128xf32>
    %51 = vector.broadcast %9 : vector<1x128xf32> to vector<2x128xf32>
    %52 = arith.addf %50, %51 : vector<2x128xf32>
    %c0_34 = arith.constant 0 : index
    %c0_35 = arith.constant 0 : index
    %53 = vector.load %arg5[%c0_34, %c0_35] : memref<2x128xf32, #tpu.memory_space<vmem>>, vector<2x128xf32>
    tpu.vector_store %arg5[%c0_34, %c0_35], %52 {strides = array<i32>} : memref<2x128xf32, #tpu.memory_space<vmem>>, vector<2x128xf32>,
    return
  }
}

</mosaic_0001>

<llo_original>
// kernel: model_forward.1
$region0: #{model_forward.1}
  #allocation0 [shape = 'u32[]', space=smem, size = 0x4, offset = 0x4, fixed_abs, tag = 'smem constant byte address 0x4 - core index']
  #allocation1 [shape = 'u32[144,128]{1,0:T(1,128)}', space=vmem, size = 0x12000, scoped, tag = 'internal scratch']
  %s0 = inlined_call_operand.vmem [shape: f32[2,128], index: 0, kind: input, shape index: {}]
  %s1 = inlined_call_operand.vmem [shape: f32[2,36,128], index: 1, kind: input, shape index: {}]
  %s2 = inlined_call_operand.vmem [shape: f32[2,128], index: 2, kind: input, shape index: {}]
  %s3 = inlined_call_operand.vmem [shape: f32[896,128], index: 3, kind: input, shape index: {}]
  %s4 = inlined_call_operand.vmem [shape: f32[8,128], index: 4, kind: input, shape index: {}]
  %s5 = inlined_call_operand.vmem [shape: f32[2,128], index: 5, kind: output, shape index: {}]
  %s6 = sld [smem:[#allocation0]]
  $region30: #{model_forward.1} parent=0
    _
  %s8 = ssub.s32 1, %s6
  %s9 = scalar_select 0, %s8, %s6
  // Predicated region
  $region2: #{model_forward.1} parent=0 // pred_check
    _
  $region3: #{model_forward.1} parent=0 // pred_check_branch
    %11 = sbr.rel (0) target = $region5
  $region4: #{model_forward.1} parent=0 // pred_region
    _
  $region5: #{model_forward.1} parent=0 // pred_fallthru
    _
  // Predicated region
  $region6: #{model_forward.1} parent=0 // pred_check
    _
  $region7: #{model_forward.1} parent=0 // pred_check_branch
    %13 = sbr.rel (0) target = $region9
  $region8: #{model_forward.1} parent=0 // pred_region
    _
  $region9: #{model_forward.1} parent=0 // pred_fallthru
    _
  // Predicated region
  $region10: #{model_forward.1} parent=0 // pred_check
    _
  $region11: #{model_forward.1} parent=0 // pred_check_branch
    %15 = sbr.rel (0) target = $region13
  $region12: #{model_forward.1} parent=0 // pred_region
    _
  $region13: #{model_forward.1} parent=0 // pred_fallthru
    _
  // Predicated region
  $region14: #{model_forward.1} parent=0 // pred_check
    _
  $region15: #{model_forward.1} parent=0 // pred_check_branch
    %17 = sbr.rel (0) target = $region17
  $region16: #{model_forward.1} parent=0 // pred_region
    _
  $region17: #{model_forward.1} parent=0 // pred_fallthru
    _
  // Predicated region
  $region18: #{model_forward.1} parent=0 // pred_check
    _
  $region19: #{model_forward.1} parent=0 // pred_check_branch
    %19 = sbr.rel (0) target = $region21
  $region20: #{model_forward.1} parent=0 // pred_region
    _
  $region21: #{model_forward.1} parent=0 // pred_fallthru
    _
  %v20 = vld [vmem:[%s3] sm:$0xff]
  %v21 = vld [vmem:[%s3 + $0x8] sm:$0xff]
  %v22 = vld [vmem:[%s3 + $0x10] sm:$0xff]
  %v23 = vld [vmem:[%s3 + $0x18] sm:$0xff]
  %v24 = vld [vmem:[%s3 + $0x20] sm:$0xff]
  %v25 = vld [vmem:[%s3 + $0x28] sm:$0xff]
  %v26 = vld [vmem:[%s3 + $0x30] sm:$0xff]
  %v27 = vld [vmem:[%s3 + $0x38] sm:$0xff]
  %v28 = vld [vmem:[%s3 + $0x40] sm:$0xff]
  %v29 = vld [vmem:[%s3 + $0x48] sm:$0xff]
  %v30 = vld [vmem:[%s3 + $0x50] sm:$0xff]
  %v31 = vld [vmem:[%s3 + $0x58] sm:$0xff]
  %v32 = vld [vmem:[%s3 + $0x60] sm:$0xff]
  %v33 = vld [vmem:[%s3 + $0x68] sm:$0xff]
  %v34 = vld [vmem:[%s3 + $0x70] sm:$0xff]
  %v35 = vld [vmem:[%s3 + $0x78] sm:$0xff]
  %v36 = vld [vmem:[%s3 + $0x80] sm:$0xff]
  %v37 = vld [vmem:[%s3 + $0x88] sm:$0xff]
  %v38 = vld [vmem:[%s3 + $0x90] sm:$0xff]
  %v39 = vld [vmem:[%s3 + $0x98] sm:$0xff]
  %v40 = vld [vmem:[%s3 + $0xa0] sm:$0xff]
  %v41 = vld [vmem:[%s3 + $0xa8] sm:$0xff]
  %v42 = vld [vmem:[%s3 + $0xb0] sm:$0xff]
  %v43 = vld [vmem:[%s3 + $0xb8] sm:$0xff]
  %v44 = vld [vmem:[%s3 + $0xc0] sm:$0xff]
  %v45 = vld [vmem:[%s3 + $0xc8] sm:$0xff]
  %v46 = vld [vmem:[%s3 + $0xd0] sm:$0xff]
  %v47 = vld [vmem:[%s3 + $0xd8] sm:$0xff]
  %v48 = vld [vmem:[%s3 + $0xe0] sm:$0xff]
  %v49 = vld [vmem:[%s3 + $0xe8] sm:$0xff]
  %v50 = vld [vmem:[%s3 + $0xf0] sm:$0xff]
  %v51 = vld [vmem:[%s3 + $0xf8] sm:$0xff]
  %v52 = vld [vmem:[%s3 + $0x100] sm:$0xff]
  %v53 = vld [vmem:[%s3 + $0x108] sm:$0xff]
  %v54 = vld [vmem:[%s3 + $0x110] sm:$0xff]
  %v55 = vld [vmem:[%s3 + $0x118] sm:$0xff]
  %v56 = vld [vmem:[%s3 + $0x120] sm:$0xff]
  %v57 = vld [vmem:[%s3 + $0x128] sm:$0xff]
  %v58 = vld [vmem:[%s3 + $0x130] sm:$0xff]
  %v59 = vld [vmem:[%s3 + $0x138] sm:$0xff]
  %v60 = vld [vmem:[%s3 + $0x140] sm:$0xff]
  %v61 = vld [vmem:[%s3 + $0x148] sm:$0xff]
  %v62 = vld [vmem:[%s3 + $0x150] sm:$0xff]
  %v63 = vld [vmem:[%s3 + $0x158] sm:$0xff]
  %v64 = vld [vmem:[%s3 + $0x160] sm:$0xff]
  %v65 = vld [vmem:[%s3 + $0x168] sm:$0xff]
  %v66 = vld [vmem:[%s3 + $0x170] sm:$0xff]
  %v67 = vld [vmem:[%s3 + $0x178] sm:$0xff]
  %v68 = vld [vmem:[%s3 + $0x180] sm:$0xff]
  %v69 = vld [vmem:[%s3 + $0x188] sm:$0xff]
  %v70 = vld [vmem:[%s3 + $0x190] sm:$0xff]
  %v71 = vld [vmem:[%s3 + $0x198] sm:$0xff]
  %v72 = vld [vmem:[%s3 + $0x1a0] sm:$0xff]
  %v73 = vld [vmem:[%s3 + $0x1a8] sm:$0xff]
  %v74 = vld [vmem:[%s3 + $0x1b0] sm:$0xff]
  %v75 = vld [vmem:[%s3 + $0x1b8] sm:$0xff]
  %v76 = vld [vmem:[%s3 + $0x1c0] sm:$0xff]
  %v77 = vld [vmem:[%s3 + $0x1c8] sm:$0xff]
  %v78 = vld [vmem:[%s3 + $0x1d0] sm:$0xff]
  %v79 = vld [vmem:[%s3 + $0x1d8] sm:$0xff]
  %v80 = vld [vmem:[%s3 + $0x1e0] sm:$0xff]
  %v81 = vld [vmem:[%s3 + $0x1e8] sm:$0xff]
  %v82 = vld [vmem:[%s3 + $0x1f0] sm:$0xff]
  %v83 = vld [vmem:[%s3 + $0x1f8] sm:$0xff]
  %v84 = vld [vmem:[%s3 + $0x200] sm:$0xff]
  %v85 = vld [vmem:[%s3 + $0x208] sm:$0xff]
  %v86 = vld [vmem:[%s3 + $0x210] sm:$0xff]
  %v87 = vld [vmem:[%s3 + $0x218] sm:$0xff]
  %v88 = vld [vmem:[%s3 + $0x220] sm:$0xff]
  %v89 = vld [vmem:[%s3 + $0x228] sm:$0xff]
  %v90 = vld [vmem:[%s3 + $0x230] sm:$0xff]
  %v91 = vld [vmem:[%s3 + $0x238] sm:$0xff]
  %v92 = vld [vmem:[%s3 + $0x240] sm:$0xff]
  %v93 = vld [vmem:[%s3 + $0x248] sm:$0xff]
  %v94 = vld [vmem:[%s3 + $0x250] sm:$0xff]
  %v95 = vld [vmem:[%s3 + $0x258] sm:$0xff]
  %v96 = vld [vmem:[%s3 + $0x260] sm:$0xff]
  %v97 = vld [vmem:[%s3 + $0x268] sm:$0xff]
  %v98 = vld [vmem:[%s3 + $0x270] sm:$0xff]
  %v99 = vld [vmem:[%s3 + $0x278] sm:$0xff]
  %v100 = vld [vmem:[%s3 + $0x280] sm:$0xff]
  %v101 = vld [vmem:[%s3 + $0x288] sm:$0xff]
  %v102 = vld [vmem:[%s3 + $0x290] sm:$0xff]
  %v103 = vld [vmem:[%s3 + $0x298] sm:$0xff]
  %v104 = vld [vmem:[%s3 + $0x2a0] sm:$0xff]
  %v105 = vld [vmem:[%s3 + $0x2a8] sm:$0xff]
  %v106 = vld [vmem:[%s3 + $0x2b0] sm:$0xff]
  %v107 = vld [vmem:[%s3 + $0x2b8] sm:$0xff]
  %v108 = vld [vmem:[%s3 + $0x2c0] sm:$0xff]
  %v109 = vld [vmem:[%s3 + $0x2c8] sm:$0xff]
  %v110 = vld [vmem:[%s3 + $0x2d0] sm:$0xff]
  %v111 = vld [vmem:[%s3 + $0x2d8] sm:$0xff]
  %v112 = vld [vmem:[%s3 + $0x2e0] sm:$0xff]
  %v113 = vld [vmem:[%s3 + $0x2e8] sm:$0xff]
  %v114 = vld [vmem:[%s3 + $0x2f0] sm:$0xff]
  %v115 = vld [vmem:[%s3 + $0x2f8] sm:$0xff]
  %v116 = vld [vmem:[%s3 + $0x300] sm:$0xff]
  %v117 = vld [vmem:[%s3 + $0x308] sm:$0xff]
  %v118 = vld [vmem:[%s3 + $0x310] sm:$0xff]
  %v119 = vld [vmem:[%s3 + $0x318] sm:$0xff]
  %v120 = vld [vmem:[%s3 + $0x320] sm:$0xff]
  %v121 = vld [vmem:[%s3 + $0x328] sm:$0xff]
  %v122 = vld [vmem:[%s3 + $0x330] sm:$0xff]
  %v123 = vld [vmem:[%s3 + $0x338] sm:$0xff]
  %v124 = vld [vmem:[%s3 + $0x340] sm:$0xff]
  %v125 = vld [vmem:[%s3 + $0x348] sm:$0xff]
  %v126 = vld [vmem:[%s3 + $0x350] sm:$0xff]
  %v127 = vld [vmem:[%s3 + $0x358] sm:$0xff]
  %v128 = vld [vmem:[%s3 + $0x360] sm:$0xff]
  %v129 = vld [vmem:[%s3 + $0x368] sm:$0xff]
  %v130 = vld [vmem:[%s3 + $0x370] sm:$0xff]
  %v131 = vld [vmem:[%s3 + $0x378] sm:$0xff]
  %v132 = vld [vmem:[%s4] sm:$0x1]
  %v133 = vld [vmem:[%s4 + $0x1] sm:$0x1]
  %v134 = vld [vmem:[%s4 + $0x2] sm:$0x1]
  %v135 = vld [vmem:[%s4 + $0x3] sm:$0x1]
  %v136 = vld [vmem:[%s4 + $0x4] sm:$0x1]
  %v137 = vld [vmem:[%s0] sm:$0x3]
  %v138 = vlaneseq
  %v139 = vshrl.u32 %v138, 7
  %v140 = vsub.s32 0, %v139
  %v141 = vrot.slane %v132, %v140
  %142 = vmatprep.subr.mxu0 0.0
  %143 = vmatpush1.msra.mxu0 %v35
  %144 = vmatprep.subr.mxu0 0.0
  %145 = vmatpush1.msra.mxu0 %v34
  %146 = vmatprep.subr.mxu0 0.0
  %147 = vmatpush1.msra.mxu0 %v33
  %148 = vmatprep.subr.mxu0 0.0
  %149 = vmatpush1.msra.mxu0 %v32
  %150 = vmatprep.subr.mxu0 0.0
  %151 = vmatpush1.msra.mxu0 %v31
  %152 = vmatprep.subr.mxu0 0.0
  %153 = vmatpush1.msra.mxu0 %v30
  %154 = vmatprep.subr.mxu0 0.0
  %155 = vmatpush1.msra.mxu0 %v29
  %156 = vmatprep.subr.mxu0 0.0
  %157 = vmatpush1.msra.mxu0 %v28
  %158 = vmatprep.subr.mxu0 0.0
  %159 = vmatpush1.msra.mxu0 %v27
  %160 = vmatprep.subr.mxu0 0.0
  %161 = vmatpush1.msra.mxu0 %v26
  %162 = vmatprep.subr.mxu0 0.0
  %163 = vmatpush1.msra.mxu0 %v25
  %164 = vmatprep.subr.mxu0 0.0
  %165 = vmatpush1.msra.mxu0 %v24
  %166 = vmatprep.subr.mxu0 0.0
  %167 = vmatpush1.msra.mxu0 %v23
  %168 = vmatprep.subr.mxu0 0.0
  %169 = vmatpush1.msra.mxu0 %v22
  %170 = vmatprep.subr.mxu0 0.0
  %171 = vmatpush1.msra.mxu0 %v21
  %172 = vmatprep.subr.mxu0 0.0
  %173 = vmatpush1.msra.mxu0 %v20
  %174 = vmatprep.subr.mxu0 0.0
  %175 = vmatpush2.msra.mxu0 0.0
  %176 = vmatprep.subr.mxu0 0.0
  %177 = vmatpush2.msra.mxu0 0.0
  %178 = vmatprep.subr.mxu0 0.0
  %179 = vmatpush2.msra.mxu0 0.0
  %180 = vmatprep.subr.mxu0 0.0
  %181 = vmatpush2.msra.mxu0 0.0
  %182 = vmatprep.subr.mxu0 0.0
  %183 = vmatpush2.msra.mxu0 0.0
  %184 = vmatprep.subr.mxu0 0.0
  %185 = vmatpush2.msra.mxu0 0.0
  %186 = vmatprep.subr.mxu0 0.0
  %187 = vmatpush2.msra.mxu0 0.0
  %188 = vmatprep.subr.mxu0 0.0
  %189 = vmatpush2.msra.mxu0 0.0
  %190 = vmatprep.subr.mxu0 0.0
  %191 = vmatpush2.msra.mxu0 0.0
  %192 = vmatprep.subr.mxu0 0.0
  %193 = vmatpush2.msra.mxu0 0.0
  %194 = vmatprep.subr.mxu0 0.0
  %195 = vmatpush2.msra.mxu0 0.0
  %196 = vmatprep.subr.mxu0 0.0
  %197 = vmatpush2.msra.mxu0 0.0
  %198 = vmatprep.subr.mxu0 0.0
  %199 = vmatpush2.msra.mxu0 0.0
  %200 = vmatprep.subr.mxu0 0.0
  %201 = vmatpush2.msra.mxu0 0.0
  %202 = vmatprep.subr.mxu0 0.0
  %203 = vmatpush2.msra.mxu0 0.0
  %204 = vmatprep.subr.mxu0 0.0
  %205 = vmatpush2.msra.mxu0 0.0
  %206 = vmatprep.mubr.f32.mxu0 0.0
  %207 = vmatmul.mubr.f32.gmra.mxu0 %v137
  %v208 = vpop.f32.mrf.mxu0
  %v209 = vadd.f32 %v141, %v208
  %v210 = vpop.f32.mrf.mxu0
  %211 = vdwg.mxu0
  %v212 = vmax.f32 %v209, 0.0
  %v213 = vld [vmem:[%s1] sm:$0xff]
  %v214 = vld [vmem:[%s1 + $0x8] sm:$0xff]
  %v215 = vld [vmem:[%s1 + $0x10] sm:$0xff]
  %v216 = vld [vmem:[%s1 + $0x18] sm:$0xff]
  %v217 = vld [vmem:[%s1 + $0x20] sm:$0xf]
  %v218 = vlaneseq
  %v219 = vshrl.u32 %v218, 7
  %v220 = vsub.s32 0, %v219
  %v221 = vrot.slane %v133, %v220
  %222 = vmatprep.subr.mxu0 0.0
  %223 = vmatpush1.msra.mxu0 %v51
  %224 = vmatprep.subr.mxu0 0.0
  %225 = vmatpush1.msra.mxu0 %v50
  %226 = vmatprep.subr.mxu0 0.0
  %227 = vmatpush1.msra.mxu0 %v49
  %228 = vmatprep.subr.mxu0 0.0
  %229 = vmatpush1.msra.mxu0 %v48
  %230 = vmatprep.subr.mxu0 0.0
  %231 = vmatpush1.msra.mxu0 %v47
  %232 = vmatprep.subr.mxu0 0.0
  %233 = vmatpush1.msra.mxu0 %v46
  %234 = vmatprep.subr.mxu0 0.0
  %235 = vmatpush1.msra.mxu0 %v45
  %236 = vmatprep.subr.mxu0 0.0
  %237 = vmatpush1.msra.mxu0 %v44
  %238 = vmatprep.subr.mxu0 0.0
  %239 = vmatpush1.msra.mxu0 %v43
  %240 = vmatprep.subr.mxu0 0.0
  %241 = vmatpush1.msra.mxu0 %v42
  %242 = vmatprep.subr.mxu0 0.0
  %243 = vmatpush1.msra.mxu0 %v41
  %244 = vmatprep.subr.mxu0 0.0
  %245 = vmatpush1.msra.mxu0 %v40
  %246 = vmatprep.subr.mxu0 0.0
  %247 = vmatpush1.msra.mxu0 %v39
  %248 = vmatprep.subr.mxu0 0.0
  %249 = vmatpush1.msra.mxu0 %v38
  %250 = vmatprep.subr.mxu0 0.0
  %251 = vmatpush1.msra.mxu0 %v37
  %252 = vmatprep.subr.mxu0 0.0
  %253 = vmatpush1.msra.mxu0 %v36
  %254 = vmatprep.subr.mxu0 0.0
  %255 = vmatpush2.msra.mxu0 0.0
  %256 = vmatprep.subr.mxu0 0.0
  %257 = vmatpush2.msra.mxu0 0.0
  %258 = vmatprep.subr.mxu0 0.0
  %259 = vmatpush2.msra.mxu0 0.0
  %260 = vmatprep.subr.mxu0 0.0
  %261 = vmatpush2.msra.mxu0 0.0
  %262 = vmatprep.subr.mxu0 0.0
  %263 = vmatpush2.msra.mxu0 0.0
  %264 = vmatprep.subr.mxu0 0.0
  %265 = vmatpush2.msra.mxu0 0.0
  %266 = vmatprep.subr.mxu0 0.0
  %267 = vmatpush2.msra.mxu0 0.0
  %268 = vmatprep.subr.mxu0 0.0
  %269 = vmatpush2.msra.mxu0 0.0
  %270 = vmatprep.subr.mxu0 0.0
  %271 = vmatpush2.msra.mxu0 0.0
  %272 = vmatprep.subr.mxu0 0.0
  %273 = vmatpush2.msra.mxu0 0.0
  %274 = vmatprep.subr.mxu0 0.0
  %275 = vmatpush2.msra.mxu0 0.0
  %276 = vmatprep.subr.mxu0 0.0
  %277 = vmatpush2.msra.mxu0 0.0
  %278 = vmatprep.subr.mxu0 0.0
  %279 = vmatpush2.msra.mxu0 0.0
  %280 = vmatprep.subr.mxu0 0.0
  %281 = vmatpush2.msra.mxu0 0.0
  %282 = vmatprep.subr.mxu0 0.0
  %283 = vmatpush2.msra.mxu0 0.0
  %284 = vmatprep.subr.mxu0 0.0
  %285 = vmatpush2.msra.mxu0 0.0
  %286 = vmatprep.mubr.f32.mxu0 0.0
  %287 = vmatmul.mubr.f32.gmra.mxu0 %v213
  %v288 = vpop.f32.mrf.mxu0
  %v289 = vadd.f32 %v221, %v288
  %v290 = vpop.f32.mrf.mxu0
  %291 = vmatprep.mubr.f32.mxu0 0.0
  %292 = vmatmul.mubr.f32.gmra.mxu0 %v214
  %v293 = vpop.f32.mrf.mxu0
  %v294 = vadd.f32 %v221, %v293
  %v295 = vpop.f32.mrf.mxu0
  %296 = vmatprep.mubr.f32.mxu0 0.0
  %297 = vmatmul.mubr.f32.gmra.mxu0 %v215
  %v298 = vpop.f32.mrf.mxu0
  %v299 = vadd.f32 %v221, %v298
  %v300 = vpop.f32.mrf.mxu0
  %301 = vmatprep.mubr.f32.mxu0 0.0
  %302 = vmatmul.mubr.f32.gmra.mxu0 %v216
  %v303 = vpop.f32.mrf.mxu0
  %v304 = vadd.f32 %v221, %v303
  %v305 = vpop.f32.mrf.mxu0
  %306 = vmatprep.mubr.f32.mxu0 0.0
  %307 = vmatmul.mubr.f32.gmra.mxu0 %v217
  %v308 = vpop.f32.mrf.mxu0
  %v309 = vadd.f32 %v221, %v308
  %v310 = vpop.f32.mrf.mxu0
  %311 = vdwg.mxu0
  %v312 = vmax.f32 %v289, 0.0
  %v313 = vmax.f32 %v294, 0.0
  %v314 = vmax.f32 %v299, 0.0
  %v315 = vmax.f32 %v304, 0.0
  %v316 = vmax.f32 %v309, 0.0
  %v317 = vadd.f32 %v312, %v313
  %v318 = vadd.f32 %v317, %v314
  %v319 = vadd.f32 %v318, %v315
  %vm320 = vcmask 1043456
  %v321 = vsel %vm320, %v316, 0.0
  %v322 = vadd.f32 %v319, %v321
  %v323 = vrot.slane %v322, 4
  %v324 = vadd.f32 %v322, %v323
  %v325 = vrot.slane %v324, 2
  %v326 = vadd.f32 %v324, %v325
  %v327 = vrot.slane %v326, 1
  %v328 = vadd.f32 %v326, %v327
  %v329 = vrcp.pop 36.0
  %v330 = vmul.f32 %v328, %v329
  %s331 = scalar_lea.vmem %s1, 40
  %v332 = vld [vmem:[%s331] sm:$0xff]
  %v333 = vld [vmem:[%s331 + $0x8] sm:$0xff]
  %v334 = vld [vmem:[%s331 + $0x10] sm:$0xff]
  %v335 = vld [vmem:[%s331 + $0x18] sm:$0xff]
  %v336 = vld [vmem:[%s331 + $0x20] sm:$0xf]
  %337 = vmatprep.subr.mxu0 0.0
  %338 = vmatpush1.msra.mxu0 %v51
  %339 = vmatprep.subr.mxu0 0.0
  %340 = vmatpush1.msra.mxu0 %v50
  %341 = vmatprep.subr.mxu0 0.0
  %342 = vmatpush1.msra.mxu0 %v49
  %343 = vmatprep.subr.mxu0 0.0
  %344 = vmatpush1.msra.mxu0 %v48
  %345 = vmatprep.subr.mxu0 0.0
  %346 = vmatpush1.msra.mxu0 %v47
  %347 = vmatprep.subr.mxu0 0.0
  %348 = vmatpush1.msra.mxu0 %v46
  %349 = vmatprep.subr.mxu0 0.0
  %350 = vmatpush1.msra.mxu0 %v45
  %351 = vmatprep.subr.mxu0 0.0
  %352 = vmatpush1.msra.mxu0 %v44
  %353 = vmatprep.subr.mxu0 0.0
  %354 = vmatpush1.msra.mxu0 %v43
  %355 = vmatprep.subr.mxu0 0.0
  %356 = vmatpush1.msra.mxu0 %v42
  %357 = vmatprep.subr.mxu0 0.0
  %358 = vmatpush1.msra.mxu0 %v41
  %359 = vmatprep.subr.mxu0 0.0
  %360 = vmatpush1.msra.mxu0 %v40
  %361 = vmatprep.subr.mxu0 0.0
  %362 = vmatpush1.msra.mxu0 %v39
  %363 = vmatprep.subr.mxu0 0.0
  %364 = vmatpush1.msra.mxu0 %v38
  %365 = vmatprep.subr.mxu0 0.0
  %366 = vmatpush1.msra.mxu0 %v37
  %367 = vmatprep.subr.mxu0 0.0
  %368 = vmatpush1.msra.mxu0 %v36
  %369 = vmatprep.subr.mxu0 0.0
  %370 = vmatpush2.msra.mxu0 0.0
  %371 = vmatprep.subr.mxu0 0.0
  %372 = vmatpush2.msra.mxu0 0.0
  %373 = vmatprep.subr.mxu0 0.0
  %374 = vmatpush2.msra.mxu0 0.0
  %375 = vmatprep.subr.mxu0 0.0
  %376 = vmatpush2.msra.mxu0 0.0
  %377 = vmatprep.subr.mxu0 0.0
  %378 = vmatpush2.msra.mxu0 0.0
  %379 = vmatprep.subr.mxu0 0.0
  %380 = vmatpush2.msra.mxu0 0.0
  %381 = vmatprep.subr.mxu0 0.0
  %382 = vmatpush2.msra.mxu0 0.0
  %383 = vmatprep.subr.mxu0 0.0
  %384 = vmatpush2.msra.mxu0 0.0
  %385 = vmatprep.subr.mxu0 0.0
  %386 = vmatpush2.msra.mxu0 0.0
  %387 = vmatprep.subr.mxu0 0.0
  %388 = vmatpush2.msra.mxu0 0.0
  %389 = vmatprep.subr.mxu0 0.0
  %390 = vmatpush2.msra.mxu0 0.0
  %391 = vmatprep.subr.mxu0 0.0
  %392 = vmatpush2.msra.mxu0 0.0
  %393 = vmatprep.subr.mxu0 0.0
  %394 = vmatpush2.msra.mxu0 0.0
  %395 = vmatprep.subr.mxu0 0.0
  %396 = vmatpush2.msra.mxu0 0.0
  %397 = vmatprep.subr.mxu0 0.0
  %398 = vmatpush2.msra.mxu0 0.0
  %399 = vmatprep.subr.mxu0 0.0
  %400 = vmatpush2.msra.mxu0 0.0
  %401 = vmatprep.mubr.f32.mxu0 0.0
  %402 = vmatmul.mubr.f32.gmra.mxu0 %v332
  %v403 = vpop.f32.mrf.mxu0
  %v404 = vadd.f32 %v221, %v403
  %v405 = vpop.f32.mrf.mxu0
  %406 = vmatprep.mubr.f32.mxu0 0.0
  %407 = vmatmul.mubr.f32.gmra.mxu0 %v333
  %v408 = vpop.f32.mrf.mxu0
  %v409 = vadd.f32 %v221, %v408
  %v410 = vpop.f32.mrf.mxu0
  %411 = vmatprep.mubr.f32.mxu0 0.0
  %412 = vmatmul.mubr.f32.gmra.mxu0 %v334
  %v413 = vpop.f32.mrf.mxu0
  %v414 = vadd.f32 %v221, %v413
  %v415 = vpop.f32.mrf.mxu0
  %416 = vmatprep.mubr.f32.mxu0 0.0
  %417 = vmatmul.mubr.f32.gmra.mxu0 %v335
  %v418 = vpop.f32.mrf.mxu0
  %v419 = vadd.f32 %v221, %v418
  %v420 = vpop.f32.mrf.mxu0
  %421 = vmatprep.mubr.f32.mxu0 0.0
  %422 = vmatmul.mubr.f32.gmra.mxu0 %v336
  %v423 = vpop.f32.mrf.mxu0
  %v424 = vadd.f32 %v221, %v423
  %v425 = vpop.f32.mrf.mxu0
  %426 = vdwg.mxu0
  %v427 = vmax.f32 %v404, 0.0
  %v428 = vmax.f32 %v409, 0.0
  %v429 = vmax.f32 %v414, 0.0
  %v430 = vmax.f32 %v419, 0.0
  %v431 = vmax.f32 %v424, 0.0
  %v432 = vadd.f32 %v427, %v428
  %v433 = vadd.f32 %v432, %v429
  %v434 = vadd.f32 %v433, %v430
  %v435 = vsel %vm320, %v431, 0.0
  %v436 = vadd.f32 %v434, %v435
  %v437 = vrot.slane %v436, 4
  %v438 = vadd.f32 %v436, %v437
  %v439 = vrot.slane %v438, 2
  %v440 = vadd.f32 %v438, %v439
  %v441 = vrot.slane %v440, 1
  %v442 = vadd.f32 %v440, %v441
  %v443 = vmul.f32 %v442, %v329
  %vm444 = vcmask 1040384
  %v445 = vsel %vm444, %v330, %v443
  %v446 = vlaneseq
  %v447 = vshrl.u32 %v446, 7
  %v448 = vsub.s32 0, %v447
  %v449 = vrot.slane %v134, %v448
  %450 = vmatprep.subr.mxu0 0.0
  %451 = vmatpush1.msra.mxu0 %v67
  %452 = vmatprep.subr.mxu0 0.0
  %453 = vmatpush1.msra.mxu0 %v66
  %454 = vmatprep.subr.mxu0 0.0
  %455 = vmatpush1.msra.mxu0 %v65
  %456 = vmatprep.subr.mxu0 0.0
  %457 = vmatpush1.msra.mxu0 %v64
  %458 = vmatprep.subr.mxu0 0.0
  %459 = vmatpush1.msra.mxu0 %v63
  %460 = vmatprep.subr.mxu0 0.0
  %461 = vmatpush1.msra.mxu0 %v62
  %462 = vmatprep.subr.mxu0 0.0
  %463 = vmatpush1.msra.mxu0 %v61
  %464 = vmatprep.subr.mxu0 0.0
  %465 = vmatpush1.msra.mxu0 %v60
  %466 = vmatprep.subr.mxu0 0.0
  %467 = vmatpush1.msra.mxu0 %v59
  %468 = vmatprep.subr.mxu0 0.0
  %469 = vmatpush1.msra.mxu0 %v58
  %470 = vmatprep.subr.mxu0 0.0
  %471 = vmatpush1.msra.mxu0 %v57
  %472 = vmatprep.subr.mxu0 0.0
  %473 = vmatpush1.msra.mxu0 %v56
  %474 = vmatprep.subr.mxu0 0.0
  %475 = vmatpush1.msra.mxu0 %v55
  %476 = vmatprep.subr.mxu0 0.0
  %477 = vmatpush1.msra.mxu0 %v54
  %478 = vmatprep.subr.mxu0 0.0
  %479 = vmatpush1.msra.mxu0 %v53
  %480 = vmatprep.subr.mxu0 0.0
  %481 = vmatpush1.msra.mxu0 %v52
  %482 = vmatprep.subr.mxu0 0.0
  %483 = vmatpush2.msra.mxu0 0.0
  %484 = vmatprep.subr.mxu0 0.0
  %485 = vmatpush2.msra.mxu0 0.0
  %486 = vmatprep.subr.mxu0 0.0
  %487 = vmatpush2.msra.mxu0 0.0
  %488 = vmatprep.subr.mxu0 0.0
  %489 = vmatpush2.msra.mxu0 0.0
  %490 = vmatprep.subr.mxu0 0.0
  %491 = vmatpush2.msra.mxu0 0.0
  %492 = vmatprep.subr.mxu0 0.0
  %493 = vmatpush2.msra.mxu0 0.0
  %494 = vmatprep.subr.mxu0 0.0
  %495 = vmatpush2.msra.mxu0 0.0
  %496 = vmatprep.subr.mxu0 0.0
  %497 = vmatpush2.msra.mxu0 0.0
  %498 = vmatprep.subr.mxu0 0.0
  %499 = vmatpush2.msra.mxu0 0.0
  %500 = vmatprep.subr.mxu0 0.0
  %501 = vmatpush2.msra.mxu0 0.0
  %502 = vmatprep.subr.mxu0 0.0
  %503 = vmatpush2.msra.mxu0 0.0
  %504 = vmatprep.subr.mxu0 0.0
  %505 = vmatpush2.msra.mxu0 0.0
  %506 = vmatprep.subr.mxu0 0.0
  %507 = vmatpush2.msra.mxu0 0.0
  %508 = vmatprep.subr.mxu0 0.0
  %509 = vmatpush2.msra.mxu0 0.0
  %510 = vmatprep.subr.mxu0 0.0
  %511 = vmatpush2.msra.mxu0 0.0
  %512 = vmatprep.subr.mxu0 0.0
  %513 = vmatpush2.msra.mxu0 0.0
  %514 = vmatprep.mubr.f32.mxu0 0.0
  %515 = vmatmul.mubr.f32.gmra.mxu0 %v445
  %v516 = vpop.f32.mrf.mxu0
  %v517 = vadd.f32 %v449, %v516
  %v518 = vpop.f32.mrf.mxu0
  %519 = vdwg.mxu0
  %v520 = vmax.f32 %v517, 0.0
  %v521 = vld [vmem:[%s2] sm:$0x3]
  %v522 = vlaneseq
  %v523 = vshrl.u32 %v522, 7
  %v524 = vsub.s32 0, %v523
  %v525 = vrot.slane %v135, %v524
  %526 = vmatprep.subr.mxu0 0.0
  %527 = vmatpush1.msra.mxu0 %v83
  %528 = vmatprep.subr.mxu0 0.0
  %529 = vmatpush1.msra.mxu0 %v82
  %530 = vmatprep.subr.mxu0 0.0
  %531 = vmatpush1.msra.mxu0 %v81
  %532 = vmatprep.subr.mxu0 0.0
  %533 = vmatpush1.msra.mxu0 %v80
  %534 = vmatprep.subr.mxu0 0.0
  %535 = vmatpush1.msra.mxu0 %v79
  %536 = vmatprep.subr.mxu0 0.0
  %537 = vmatpush1.msra.mxu0 %v78
  %538 = vmatprep.subr.mxu0 0.0
  %539 = vmatpush1.msra.mxu0 %v77
  %540 = vmatprep.subr.mxu0 0.0
  %541 = vmatpush1.msra.mxu0 %v76
  %542 = vmatprep.subr.mxu0 0.0
  %543 = vmatpush1.msra.mxu0 %v75
  %544 = vmatprep.subr.mxu0 0.0
  %545 = vmatpush1.msra.mxu0 %v74
  %546 = vmatprep.subr.mxu0 0.0
  %547 = vmatpush1.msra.mxu0 %v73
  %548 = vmatprep.subr.mxu0 0.0
  %549 = vmatpush1.msra.mxu0 %v72
  %550 = vmatprep.subr.mxu0 0.0
  %551 = vmatpush1.msra.mxu0 %v71
  %552 = vmatprep.subr.mxu0 0.0
  %553 = vmatpush1.msra.mxu0 %v70
  %554 = vmatprep.subr.mxu0 0.0
  %555 = vmatpush1.msra.mxu0 %v69
  %556 = vmatprep.subr.mxu0 0.0
  %557 = vmatpush1.msra.mxu0 %v68
  %558 = vmatprep.subr.mxu0 0.0
  %559 = vmatpush2.msra.mxu0 %v99
  %560 = vmatprep.subr.mxu0 0.0
  %561 = vmatpush2.msra.mxu0 %v98
  %562 = vmatprep.subr.mxu0 0.0
  %563 = vmatpush2.msra.mxu0 %v97
  %564 = vmatprep.subr.mxu0 0.0
  %565 = vmatpush2.msra.mxu0 %v96
  %566 = vmatprep.subr.mxu0 0.0
  %567 = vmatpush2.msra.mxu0 %v95
  %568 = vmatprep.subr.mxu0 0.0
  %569 = vmatpush2.msra.mxu0 %v94
  %570 = vmatprep.subr.mxu0 0.0
  %571 = vmatpush2.msra.mxu0 %v93
  %572 = vmatprep.subr.mxu0 0.0
  %573 = vmatpush2.msra.mxu0 %v92
  %574 = vmatprep.subr.mxu0 0.0
  %575 = vmatpush2.msra.mxu0 %v91
  %576 = vmatprep.subr.mxu0 0.0
  %577 = vmatpush2.msra.mxu0 %v90
  %578 = vmatprep.subr.mxu0 0.0
  %579 = vmatpush2.msra.mxu0 %v89
  %580 = vmatprep.subr.mxu0 0.0
  %581 = vmatpush2.msra.mxu0 %v88
  %582 = vmatprep.subr.mxu0 0.0
  %583 = vmatpush2.msra.mxu0 %v87
  %584 = vmatprep.subr.mxu0 0.0
  %585 = vmatpush2.msra.mxu0 %v86
  %586 = vmatprep.subr.mxu0 0.0
  %587 = vmatpush2.msra.mxu0 %v85
  %588 = vmatprep.subr.mxu0 0.0
  %589 = vmatpush2.msra.mxu0 %v84
  %590 = vmatprep.mubr.f32.mxu0 %v520
  %591 = vmatmul.mubr.f32.gmra.mxu0 %v212
  %v592 = vpop.f32.mrf.mxu0
  %v593 = vadd.f32 %v525, %v592
  %v594 = vpop.f32.mrf.mxu0
  %595 = vdwg.mxu0
  %596 = vmatprep.subr.mxu0 0.0
  %597 = vmatpush1.msra.mxu0 %v115
  %598 = vmatprep.subr.mxu0 0.0
  %599 = vmatpush1.msra.mxu0 %v114
  %600 = vmatprep.subr.mxu0 0.0
  %601 = vmatpush1.msra.mxu0 %v113
  %602 = vmatprep.subr.mxu0 0.0
  %603 = vmatpush1.msra.mxu0 %v112
  %604 = vmatprep.subr.mxu0 0.0
  %605 = vmatpush1.msra.mxu0 %v111
  %606 = vmatprep.subr.mxu0 0.0
  %607 = vmatpush1.msra.mxu0 %v110
  %608 = vmatprep.subr.mxu0 0.0
  %609 = vmatpush1.msra.mxu0 %v109
  %610 = vmatprep.subr.mxu0 0.0
  %611 = vmatpush1.msra.mxu0 %v108
  %612 = vmatprep.subr.mxu0 0.0
  %613 = vmatpush1.msra.mxu0 %v107
  %614 = vmatprep.subr.mxu0 0.0
  %615 = vmatpush1.msra.mxu0 %v106
  %616 = vmatprep.subr.mxu0 0.0
  %617 = vmatpush1.msra.mxu0 %v105
  %618 = vmatprep.subr.mxu0 0.0
  %619 = vmatpush1.msra.mxu0 %v104
  %620 = vmatprep.subr.mxu0 0.0
  %621 = vmatpush1.msra.mxu0 %v103
  %622 = vmatprep.subr.mxu0 0.0
  %623 = vmatpush1.msra.mxu0 %v102
  %624 = vmatprep.subr.mxu0 0.0
  %625 = vmatpush1.msra.mxu0 %v101
  %626 = vmatprep.subr.mxu0 0.0
  %627 = vmatpush1.msra.mxu0 %v100
  %628 = vmatprep.subr.mxu0 0.0
  %629 = vmatpush2.msra.mxu0 0.0
  %630 = vmatprep.subr.mxu0 0.0
  %631 = vmatpush2.msra.mxu0 0.0
  %632 = vmatprep.subr.mxu0 0.0
  %633 = vmatpush2.msra.mxu0 0.0
  %634 = vmatprep.subr.mxu0 0.0
  %635 = vmatpush2.msra.mxu0 0.0
  %636 = vmatprep.subr.mxu0 0.0
  %637 = vmatpush2.msra.mxu0 0.0
  %638 = vmatprep.subr.mxu0 0.0
  %639 = vmatpush2.msra.mxu0 0.0
  %640 = vmatprep.subr.mxu0 0.0
  %641 = vmatpush2.msra.mxu0 0.0
  %642 = vmatprep.subr.mxu0 0.0
  %643 = vmatpush2.msra.mxu0 0.0
  %644 = vmatprep.subr.mxu0 0.0
  %645 = vmatpush2.msra.mxu0 0.0
  %646 = vmatprep.subr.mxu0 0.0
  %647 = vmatpush2.msra.mxu0 0.0
  %648 = vmatprep.subr.mxu0 0.0
  %649 = vmatpush2.msra.mxu0 0.0
  %650 = vmatprep.subr.mxu0 0.0
  %651 = vmatpush2.msra.mxu0 0.0
  %652 = vmatprep.subr.mxu0 0.0
  %653 = vmatpush2.msra.mxu0 0.0
  %654 = vmatprep.subr.mxu0 0.0
  %655 = vmatpush2.msra.mxu0 0.0
  %656 = vmatprep.subr.mxu0 0.0
  %657 = vmatpush2.msra.mxu0 0.0
  %658 = vmatprep.subr.mxu0 0.0
  %659 = vmatpush2.msra.mxu0 0.0
  %660 = vmatprep.mubr.f32.mxu0 0.0
  %661 = vmatmul.mubr.f32.gmra.mxu0 %v521
  %v662 = vpop.f32.mrf.mxu0
  %v663 = vadd.f32 %v593, %v662
  %v664 = vpop.f32.mrf.mxu0
  %665 = vdwg.mxu0
  %v666 = vtanh.pop %v663
  %v667 = vlaneseq
  %v668 = vshrl.u32 %v667, 7
  %v669 = vsub.s32 0, %v668
  %v670 = vrot.slane %v136, %v669
  %671 = vmatprep.subr.mxu0 0.0
  %672 = vmatpush1.msra.mxu0 %v131
  %673 = vmatprep.subr.mxu0 0.0
  %674 = vmatpush1.msra.mxu0 %v130
  %675 = vmatprep.subr.mxu0 0.0
  %676 = vmatpush1.msra.mxu0 %v129
  %677 = vmatprep.subr.mxu0 0.0
  %678 = vmatpush1.msra.mxu0 %v128
  %679 = vmatprep.subr.mxu0 0.0
  %680 = vmatpush1.msra.mxu0 %v127
  %681 = vmatprep.subr.mxu0 0.0
  %682 = vmatpush1.msra.mxu0 %v126
  %683 = vmatprep.subr.mxu0 0.0
  %684 = vmatpush1.msra.mxu0 %v125
  %685 = vmatprep.subr.mxu0 0.0
  %686 = vmatpush1.msra.mxu0 %v124
  %687 = vmatprep.subr.mxu0 0.0
  %688 = vmatpush1.msra.mxu0 %v123
  %689 = vmatprep.subr.mxu0 0.0
  %690 = vmatpush1.msra.mxu0 %v122
  %691 = vmatprep.subr.mxu0 0.0
  %692 = vmatpush1.msra.mxu0 %v121
  %693 = vmatprep.subr.mxu0 0.0
  %694 = vmatpush1.msra.mxu0 %v120
  %695 = vmatprep.subr.mxu0 0.0
  %696 = vmatpush1.msra.mxu0 %v119
  %697 = vmatprep.subr.mxu0 0.0
  %698 = vmatpush1.msra.mxu0 %v118
  %699 = vmatprep.subr.mxu0 0.0
  %700 = vmatpush1.msra.mxu0 %v117
  %701 = vmatprep.subr.mxu0 0.0
  %702 = vmatpush1.msra.mxu0 %v116
  %703 = vmatprep.subr.mxu0 0.0
  %704 = vmatpush2.msra.mxu0 0.0
  %705 = vmatprep.subr.mxu0 0.0
  %706 = vmatpush2.msra.mxu0 0.0
  %707 = vmatprep.subr.mxu0 0.0
  %708 = vmatpush2.msra.mxu0 0.0
  %709 = vmatprep.subr.mxu0 0.0
  %710 = vmatpush2.msra.mxu0 0.0
  %711 = vmatprep.subr.mxu0 0.0
  %712 = vmatpush2.msra.mxu0 0.0
  %713 = vmatprep.subr.mxu0 0.0
  %714 = vmatpush2.msra.mxu0 0.0
  %715 = vmatprep.subr.mxu0 0.0
  %716 = vmatpush2.msra.mxu0 0.0
  %717 = vmatprep.subr.mxu0 0.0
  %718 = vmatpush2.msra.mxu0 0.0
  %719 = vmatprep.subr.mxu0 0.0
  %720 = vmatpush2.msra.mxu0 0.0
  %721 = vmatprep.subr.mxu0 0.0
  %722 = vmatpush2.msra.mxu0 0.0
  %723 = vmatprep.subr.mxu0 0.0
  %724 = vmatpush2.msra.mxu0 0.0
  %725 = vmatprep.subr.mxu0 0.0
  %726 = vmatpush2.msra.mxu0 0.0
  %727 = vmatprep.subr.mxu0 0.0
  %728 = vmatpush2.msra.mxu0 0.0
  %729 = vmatprep.subr.mxu0 0.0
  %730 = vmatpush2.msra.mxu0 0.0
  %731 = vmatprep.subr.mxu0 0.0
  %732 = vmatpush2.msra.mxu0 0.0
  %733 = vmatprep.subr.mxu0 0.0
  %734 = vmatpush2.msra.mxu0 0.0
  %735 = vmatprep.mubr.f32.mxu0 0.0
  %736 = vmatmul.mubr.f32.gmra.mxu0 %v666
  %v737 = vpop.f32.mrf.mxu0
  %v738 = vadd.f32 %v670, %v737
  %v739 = vpop.f32.mrf.mxu0
  %740 = vdwg.mxu0
  %741 = vst [vmem:[%s5] sm:$0x3] %v738
  // Predicated region
  $region22: #{model_forward.1} parent=0 // pred_check
    _
  $region23: #{model_forward.1} parent=0 // pred_check_branch
    %743 = sbr.rel (0) target = $region25
  $region24: #{model_forward.1} parent=0 // pred_region
    _
  $region25: #{model_forward.1} parent=0 // pred_fallthru
    _
  // Predicated region
  $region26: #{model_forward.1} parent=0 // pred_check
    _
  $region27: #{model_forward.1} parent=0 // pred_check_branch
    %745 = sbr.rel (0) target = $region29
  $region28: #{model_forward.1} parent=0 // pred_region
    _
  $region29: #{model_forward.1} parent=0 // pred_fallthru
    _

</llo_original>
